<compile_context>
chip_gen: v7x
topology: tpu7x:2x2x1
jax: 0.10.0
libtpu: 0.0.40
codegen_flags: <defaults>
</compile_context>

<pallas_src>
import jax
import jax.numpy as jnp
from jax import lax
from jax.experimental import pallas as pl
from jax.experimental.pallas import tpu as pltpu


def _round_up(x, m):
    return ((x + m - 1) // m) * m


def _lstm_kt_kernel(gx_ref, wq_ref, bq_ref, whh_ref, pred_ref, h_ref, c_ref, hall_ref):
    """One (batch-tile, time-chunk) grid step.

    gx_ref:  [Tc, Bt, 4H]  precomputed x@W_ih^T + b_ih + b_hh (gathered per timestep)
    wq_ref:  [Tc, Bt, H]   W_out row for the next question of each (t, b)
    bq_ref:  [Tc, Bt]      b_out entry for the next question
    whh_ref: [H, 4H]       recurrent weights (W_hh^T)
    pred_ref:[Bt, Tc]      lane-dense output block
    h/c:     [Bt, H]       recurrent state (persists across time chunks)
    hall:    [Tc, Bt, H]   hidden states of this chunk (for the fused output projection)
    """
    chunk = pl.program_id(1)                     # time-chunk index (sequential axis)

    @pl.when(chunk == 0)
    def _():
        h_ref[...] = jnp.zeros_like(h_ref)
        c_ref[...] = jnp.zeros_like(c_ref)

    H = h_ref.shape[-1]
    Tc = gx_ref.shape[0]
    w_hh = whh_ref[...]                          # hoist the (tiny) weight load out of the loop

    def step(tt, carry):
        gates = gx_ref[tt] + jnp.dot(h_ref[...], w_hh,
                                     preferred_element_type=jnp.float32)   # [Bt, 4H]
        i_g = jax.nn.sigmoid(gates[:, 0 * H:1 * H])
        f_g = jax.nn.sigmoid(gates[:, 1 * H:2 * H])
        g_g = jnp.tanh(gates[:, 2 * H:3 * H])
        o_g = jax.nn.sigmoid(gates[:, 3 * H:4 * H])
        c_new = f_g * c_ref[...] + i_g * g_g
        h_new = o_g * jnp.tanh(c_new)
        c_ref[...] = c_new
        h_ref[...] = h_new
        hall_ref[tt] = h_new
        return carry

    lax.fori_loop(0, Tc, step, 0)

    # pred[b, t] = sigmoid( h_t[b] . W_out[q_{t+1}[b]] + b_out[q_{t+1}[b]] )
    z = jnp.sum(hall_ref[...] * wq_ref[...], axis=-1) + bq_ref[...]        # [Tc, Bt]
    pred_ref[...] = jnp.transpose(jax.nn.sigmoid(z), (1, 0))               # [Bt, Tc]


def lstm_kt_forward(features, questions, params, feature_dim, hidden_dim, output_dim):
    """features, questions: int32 [B, S]. Returns pred: float32 [B, S-1]."""
    B, S = features.shape
    F, H, O = feature_dim, hidden_dim, output_dim
    T = S - 1

    # ---- weights in kernel-friendly orientation; fold one-hot matmuls into gathers ----
    w_ih_t = params["weight_ih"].T.astype(jnp.float32)                     # [F, 4H]
    b_gate = (params["bias_ih"] + params["bias_hh"]).astype(jnp.float32)   # [4H]
    gate_tbl = w_ih_t + b_gate[None, :]
    gate_tbl = gate_tbl.at[0].set(b_gate)        # index 0 == padding -> zero input (+bias)

    w_hh = params["weight_hh"].T.astype(jnp.float32)                       # [H, 4H]
    w_out = params["fout_weight"].astype(jnp.float32)                      # [O, H]
    b_out = params["fout_bias"].astype(jnp.float32)                        # [O]

    # ---- tiling / padding ----
    B_pad = _round_up(B, 8)
    Bt = B_pad if B_pad <= 256 else 256          # batch tile (parallel / megacore axis)
    B_pad = _round_up(B_pad, Bt)
    Tc = _round_up(T, 8) if T <= 128 else 128    # time chunk (lane-dense output width)
    T_pad = _round_up(T, Tc)
    nb, nc = B_pad // Bt, T_pad // Tc

    # ---- gathers, produced directly time-major (only an int [S,B] transpose is needed) ----
    feat_tm = jnp.transpose(features[:, :T], (1, 0))                       # [T, B] int
    next_q_tm = jnp.transpose(questions[:, 1:], (1, 0))                    # [T, B] int

    gx = jnp.take(gate_tbl, feat_tm, axis=0)                               # [T, B, 4H]
    wq = jnp.take(w_out, next_q_tm, axis=0)                                # [T, B, H]
    bq = jnp.take(b_out, next_q_tm, axis=0)                                # [T, B]

    gx = jnp.pad(gx, ((0, T_pad - T), (0, B_pad - B), (0, 0)))
    wq = jnp.pad(wq, ((0, T_pad - T), (0, B_pad - B), (0, 0)))
    bq = jnp.pad(bq, ((0, T_pad - T), (0, B_pad - B)))

    # ---- VMEM budget & cost hints ----
    blk_bytes = 4 * (Tc * Bt * 4 * H + Tc * Bt * H + Tc * Bt + H * 4 * H + Bt * Tc)
    scratch_bytes = 4 * (2 * Bt * H + Tc * Bt * H)
    vmem_limit = int(min(max(2 * blk_bytes + scratch_bytes, 8 << 20), 64 << 20))

    cost = pl.CostEstimate(
        flops=int(2 * B_pad * T_pad * H * 4 * H + 14 * B_pad * T_pad * H),
        transcendentals=int(5 * B_pad * T_pad * H + B_pad * T_pad),
        bytes_accessed=int(4 * (T_pad * B_pad * (4 * H + H + 1)
                                + H * 4 * H + B_pad * T_pad)),
    )

    pred_pad = pl.pallas_call(
        _lstm_kt_kernel,
        out_shape=jax.ShapeDtypeStruct((B_pad, T_pad), jnp.float32),
        grid_spec=pltpu.PrefetchScalarGridSpec(
            num_scalar_prefetch=0,
            grid=(nb, nc),
            in_specs=[
                pl.BlockSpec((Tc, Bt, 4 * H), lambda b, c: (c, b, 0)),     # gx
                pl.BlockSpec((Tc, Bt, H), lambda b, c: (c, b, 0)),         # wq
                pl.BlockSpec((Tc, Bt), lambda b, c: (c, b)),               # bq
                pl.BlockSpec((H, 4 * H), lambda b, c: (0, 0)),             # w_hh
            ],
            out_specs=pl.BlockSpec((Bt, Tc), lambda b, c: (b, c)),         # pred (lane-dense)
            scratch_shapes=[
                pltpu.VMEM((Bt, H), jnp.float32),                          # h
                pltpu.VMEM((Bt, H), jnp.float32),                          # c
                pltpu.VMEM((Tc, Bt, H), jnp.float32),                      # h of the chunk
            ],
        ),
        compiler_params=pltpu.CompilerParams(
            dimension_semantics=("parallel", "arbitrary"),                 # batch || , time seq
            vmem_limit_bytes=vmem_limit,
        ),
        cost_estimate=cost,
    )(gx, wq, bq, w_hh)

    pred = pred_pad[:B, :T]
    return jnp.where(questions[:, 1:] != 0, pred, 0.0)                     # padding -> 0


def init_params(key, feature_dim, hidden_dim, output_dim):
    """Deterministic synthetic init mirroring lstmKT.init_weights()."""
    F, H, O = feature_dim, hidden_dim, output_dim
    k1, k2, k3, k4, k5, k6 = jax.random.split(key, 6)
    ortho = jax.nn.initializers.orthogonal()
    xavier_n = jax.nn.initializers.glorot_normal()
    bound = 1.0 / jnp.sqrt(H)
    return {
        "weight_ih": ortho(k1, (4 * H, F), jnp.float32),            # orthogonal_
        "weight_hh": ortho(k2, (4 * H, H), jnp.float32),            # orthogonal_
        "bias_ih": jax.random.uniform(k3, (4 * H,), jnp.float32, -bound, bound),
        "bias_hh": jax.random.uniform(k4, (4 * H,), jnp.float32, -bound, bound),
        "fout_weight": xavier_n(k5, (O, H), jnp.float32),           # xavier_normal_
        "fout_bias": jax.random.uniform(k6, (O,), jnp.float32, -bound, bound),
    }


def _reference_forward(features, questions, params, F, H, O):
    """Pure-JAX reference (lax.scan LSTM) for a correctness check."""
    feat_oh = jnp.where((features != 0)[..., None],
                        jax.nn.one_hot(features, F, dtype=jnp.float32), 0.0)
    w_ih, w_hh = params["weight_ih"], params["weight_hh"]
    b = params["bias_ih"] + params["bias_hh"]
    B = features.shape[0]

    def step(carry, x_t):
        h, c = carry
        gates = x_t @ w_ih.T + h @ w_hh.T + b
        i = jax.nn.sigmoid(gates[:, 0 * H:1 * H])
        f = jax.nn.sigmoid(gates[:, 1 * H:2 * H])
        g = jnp.tanh(gates[:, 2 * H:3 * H])
        o = jax.nn.sigmoid(gates[:, 3 * H:4 * H])
        c = f * c + i * g
        h = o * jnp.tanh(c)
        return (h, c), h

    h0 = jnp.zeros((B, H), jnp.float32)
    _, hs = jax.lax.scan(step, (h0, h0), jnp.transpose(feat_oh, (1, 0, 2)))
    out = jnp.transpose(hs, (1, 0, 2))                              # [B, S, H]
    yt = jax.nn.sigmoid(out @ params["fout_weight"].T + params["fout_bias"])[:, :-1, :]
    next_qt = questions[:, 1:]
    qmask = jnp.where((next_qt != 0)[..., None],
                      jax.nn.one_hot(next_qt, O, dtype=jnp.float32), 0.0)
    return jnp.sum(yt * qmask, axis=-1)


if __name__ == "__main__":
    B, S = 4, 8
    feature_dim, hidden_dim, output_dim = 64, 32, 32

    key = jax.random.PRNGKey(0)
    kp, kf, kq = jax.random.split(key, 3)
    params = init_params(kp, feature_dim, hidden_dim, output_dim)

    # indices; 0 means padding, valid features in [1, F-1], valid questions in [1, O-1]
    features = jax.random.randint(kf, (B, S), 0, feature_dim, dtype=jnp.int32)
    questions = jax.random.randint(kq, (B, S), 0, output_dim, dtype=jnp.int32)

    fwd = jax.jit(lstm_kt_forward, static_argnums=(3, 4, 5))
    pred = fwd(features, questions, params, feature_dim, hidden_dim, output_dim)
    pred = jax.block_until_ready(pred)

    ref = _reference_forward(features, questions, params,
                             feature_dim, hidden_dim, output_dim)
    assert pred.shape == (B, S - 1)
    assert jnp.allclose(pred, ref, atol=1e-5, rtol=1e-5)

    print("KERNEL_OK")
</pallas_src>

<mosaic_0001>
module attributes {stable_mosaic.version = 11 : i64} {
  func.func @_lstm_kt_kernel(%arg0: i32, %arg1: i32, %arg2: memref<8x8x128xf32, #tpu.memory_space<vmem>>, %arg3: memref<8x8x32xf32, #tpu.memory_space<vmem>>, %arg4: memref<8x8xf32, #tpu.memory_space<vmem>>, %arg5: memref<32x128xf32, #tpu.memory_space<vmem>>, %arg6: memref<8x8xf32, #tpu.memory_space<vmem>>, %arg7: memref<8x32xf32, #tpu.memory_space<vmem>>, %arg8: memref<8x32xf32, #tpu.memory_space<vmem>>, %arg9: memref<8x8x32xf32, #tpu.memory_space<vmem>>) attributes {dimension_semantics = [#tpu.dimension_semantics<parallel>, #tpu.dimension_semantics<arbitrary>], iteration_bounds = array<i64: 1, 1>, scalar_prefetch = 0 : i64, scratch_operands = 3 : i64, tpu.core_type = #tpu.core_type<tc>, window_params = [{transform_indices = @transform_0, window_bounds = array<i64: 8, 8, 128>}, {transform_indices = @transform_1, window_bounds = array<i64: 8, 8, 32>}, {transform_indices = @transform_2, window_bounds = array<i64: 8, 8>}, {pipeline_mode = #tpu.pipeline_mode<synchronous>, transform_indices = @transform_3, window_bounds = array<i64: 32, 128>}, {transform_indices = @transform_4, window_bounds = array<i64: 8, 8>}]} {
    %c0_i32 = arith.constant 0 : i32
    %0 = arith.cmpi eq, %arg1, %c0_i32 : i32
    %1 = arith.extui %0 : i1 to i32
    %c0_i32_0 = arith.constant 0 : i32
    %2 = arith.cmpi ne, %1, %c0_i32_0 : i32
    scf.if %2 {
      %cst_15 = arith.constant 0.000000e+00 : f32
      %18 = vector.broadcast %cst_15 : f32 to vector<8x32xf32>
      %c0_16 = arith.constant 0 : index
      %c0_17 = arith.constant 0 : index
      %19 = vector.load %arg7[%c0_16, %c0_17] : memref<8x32xf32, #tpu.memory_space<vmem>>, vector<8x32xf32>
      tpu.vector_store %arg7[%c0_16, %c0_17], %18 {strides = array<i32>} : memref<8x32xf32, #tpu.memory_space<vmem>>, vector<8x32xf32>,
      %cst_18 = arith.constant 0.000000e+00 : f32
      %20 = vector.broadcast %cst_18 : f32 to vector<8x32xf32>
      %c0_19 = arith.constant 0 : index
      %c0_20 = arith.constant 0 : index
      %21 = vector.load %arg8[%c0_19, %c0_20] : memref<8x32xf32, #tpu.memory_space<vmem>>, vector<8x32xf32>
      tpu.vector_store %arg8[%c0_19, %c0_20], %20 {strides = array<i32>} : memref<8x32xf32, #tpu.memory_space<vmem>>, vector<8x32xf32>,
    } else {
    }
    %c0 = arith.constant 0 : index
    %c0_1 = arith.constant 0 : index
    %3 = vector.load %arg5[%c0, %c0_1] : memref<32x128xf32, #tpu.memory_space<vmem>>, vector<32x128xf32>
    %c0_i32_2 = arith.constant 0 : i32
    %c8_i32 = arith.constant 8 : i32
    %4 = arith.addi %c0_i32_2, %c8_i32 : i32
    %c1_i32 = arith.constant 1 : i32
    scf.for %arg10 = %c0_i32_2 to %4 step %c1_i32  : i32 {
      %18 = arith.index_cast %arg10 : i32 to index
      %c0_15 = arith.constant 0 : index
      %c0_16 = arith.constant 0 : index
      %19 = vector.load %arg2[%18, %c0_15, %c0_16] : memref<8x8x128xf32, #tpu.memory_space<vmem>>, vector<1x8x128xf32>
      %20 = vector.shape_cast %19 : vector<1x8x128xf32> to vector<8x128xf32>
      %c0_17 = arith.constant 0 : index
      %c0_18 = arith.constant 0 : index
      %21 = vector.load %arg7[%c0_17, %c0_18] : memref<8x32xf32, #tpu.memory_space<vmem>>, vector<8x32xf32>
      %cst_19 = arith.constant dense<0.000000e+00> : vector<8x128xf32>
      %22 = tpu.matmul %21, %3, %cst_19 {dimension_numbers = #tpu.dot_dimension_numbers<[1], [0], [0], [1], [0, 0, 1, 1], [], []>} : vector<8x32xf32>, vector<32x128xf32>, vector<8x128xf32> -> vector<8x128xf32>
      %23 = arith.addf %20, %22 : vector<8x128xf32>
      %24 = vector.extract_strided_slice %23 {offsets = [0, 0], sizes = [8, 32], strides = [1, 1]} : vector<8x128xf32> to vector<8x32xf32>
      %25 = arith.negf %24 : vector<8x32xf32>
      %26 = math.exp %25 : vector<8x32xf32>
      %cst_20 = arith.constant 1.000000e+00 : f32
      %27 = vector.broadcast %cst_20 : f32 to vector<8x32xf32>
      %28 = arith.addf %27, %26 : vector<8x32xf32>
      %29 = arith.divf %27, %28 : vector<8x32xf32>
      %30 = vector.extract_strided_slice %23 {offsets = [0, 32], sizes = [8, 32], strides = [1, 1]} : vector<8x128xf32> to vector<8x32xf32>
      %31 = arith.negf %30 : vector<8x32xf32>
      %32 = math.exp %31 : vector<8x32xf32>
      %cst_21 = arith.constant 1.000000e+00 : f32
      %33 = vector.broadcast %cst_21 : f32 to vector<8x32xf32>
      %34 = arith.addf %33, %32 : vector<8x32xf32>
      %35 = arith.divf %33, %34 : vector<8x32xf32>
      %36 = vector.extract_strided_slice %23 {offsets = [0, 64], sizes = [8, 32], strides = [1, 1]} : vector<8x128xf32> to vector<8x32xf32>
      %37 = math.tanh %36 : vector<8x32xf32>
      %38 = vector.extract_strided_slice %23 {offsets = [0, 96], sizes = [8, 32], strides = [1, 1]} : vector<8x128xf32> to vector<8x32xf32>
      %39 = arith.negf %38 : vector<8x32xf32>
      %40 = math.exp %39 : vector<8x32xf32>
      %cst_22 = arith.constant 1.000000e+00 : f32
      %41 = vector.broadcast %cst_22 : f32 to vector<8x32xf32>
      %42 = arith.addf %41, %40 : vector<8x32xf32>
      %43 = arith.divf %41, %42 : vector<8x32xf32>
      %c0_23 = arith.constant 0 : index
      %c0_24 = arith.constant 0 : index
      %44 = vector.load %arg8[%c0_23, %c0_24] : memref<8x32xf32, #tpu.memory_space<vmem>>, vector<8x32xf32>
      %45 = arith.mulf %35, %44 : vector<8x32xf32>
      %46 = arith.mulf %29, %37 : vector<8x32xf32>
      %47 = arith.addf %45, %46 : vector<8x32xf32>
      %48 = math.tanh %47 : vector<8x32xf32>
      %49 = arith.mulf %43, %48 : vector<8x32xf32>
      %c0_25 = arith.constant 0 : index
      %c0_26 = arith.constant 0 : index
      %50 = vector.load %arg8[%c0_25, %c0_26] : memref<8x32xf32, #tpu.memory_space<vmem>>, vector<8x32xf32>
      tpu.vector_store %arg8[%c0_25, %c0_26], %47 {strides = array<i32>} : memref<8x32xf32, #tpu.memory_space<vmem>>, vector<8x32xf32>,
      %c0_27 = arith.constant 0 : index
      %c0_28 = arith.constant 0 : index
      %51 = vector.load %arg7[%c0_27, %c0_28] : memref<8x32xf32, #tpu.memory_space<vmem>>, vector<8x32xf32>
      tpu.vector_store %arg7[%c0_27, %c0_28], %49 {strides = array<i32>} : memref<8x32xf32, #tpu.memory_space<vmem>>, vector<8x32xf32>,
      %52 = arith.index_cast %arg10 : i32 to index
      %c0_29 = arith.constant 0 : index
      %c0_30 = arith.constant 0 : index
      %53 = vector.load %arg9[%52, %c0_29, %c0_30] : memref<8x8x32xf32, #tpu.memory_space<vmem>>, vector<1x8x32xf32>
      %54 = vector.shape_cast %53 : vector<1x8x32xf32> to vector<8x32xf32>
      %55 = vector.shape_cast %49 : vector<8x32xf32> to vector<1x8x32xf32>
      tpu.vector_store %arg9[%52, %c0_29, %c0_30], %55 {strides = array<i32>} : memref<8x8x32xf32, #tpu.memory_space<vmem>>, vector<1x8x32xf32>,
    }
    %c8_i32_3 = arith.constant 8 : i32
    %c0_4 = arith.constant 0 : index
    %c0_5 = arith.constant 0 : index
    %c0_6 = arith.constant 0 : index
    %5 = vector.load %arg9[%c0_4, %c0_5, %c0_6] : memref<8x8x32xf32, #tpu.memory_space<vmem>>, vector<8x8x32xf32>
    %c0_7 = arith.constant 0 : index
    %c0_8 = arith.constant 0 : index
    %c0_9 = arith.constant 0 : index
    %6 = vector.load %arg3[%c0_7, %c0_8, %c0_9] : memref<8x8x32xf32, #tpu.memory_space<vmem>>, vector<8x8x32xf32>
    %7 = arith.mulf %5, %6 : vector<8x8x32xf32>
    %cst = arith.constant dense<0.000000e+00> : vector<8x8xf32>
    %8 = vector.multi_reduction <add>, %7, %cst [2] : vector<8x8x32xf32> to vector<8x8xf32>
    %c0_10 = arith.constant 0 : index
    %c0_11 = arith.constant 0 : index
    %9 = vector.load %arg4[%c0_10, %c0_11] : memref<8x8xf32, #tpu.memory_space<vmem>>, vector<8x8xf32>
    %10 = arith.addf %8, %9 : vector<8x8xf32>
    %11 = arith.negf %10 : vector<8x8xf32>
    %12 = math.exp %11 : vector<8x8xf32>
    %cst_12 = arith.constant 1.000000e+00 : f32
    %13 = vector.broadcast %cst_12 : f32 to vector<8x8xf32>
    %14 = arith.addf %13, %12 : vector<8x8xf32>
    %15 = arith.divf %13, %14 : vector<8x8xf32>
    %16 = tpu.transpose %15, [1, 0] : vector<8x8xf32> -> vector<8x8xf32>
    %c0_13 = arith.constant 0 : index
    %c0_14 = arith.constant 0 : index
    %17 = vector.load %arg6[%c0_13, %c0_14] : memref<8x8xf32, #tpu.memory_space<vmem>>, vector<8x8xf32>
    tpu.vector_store %arg6[%c0_13, %c0_14], %16 {strides = array<i32>} : memref<8x8xf32, #tpu.memory_space<vmem>>, vector<8x8xf32>,
    return
  }
  func.func @transform_0(%arg0: i32, %arg1: i32) -> (i32, i32, i32) {
    %c0_i32 = arith.constant 0 : i32
    %c0_i32_0 = arith.constant 0 : i32
    return %arg1, %arg0, %c0_i32 : i32, i32, i32
  }
  func.func @transform_1(%arg0: i32, %arg1: i32) -> (i32, i32, i32) {
    %c0_i32 = arith.constant 0 : i32
    %c0_i32_0 = arith.constant 0 : i32
    return %arg1, %arg0, %c0_i32 : i32, i32, i32
  }
  func.func @transform_2(%arg0: i32, %arg1: i32) -> (i32, i32) {
    %c0_i32 = arith.constant 0 : i32
    return %arg1, %arg0 : i32, i32
  }
  func.func @transform_3(%arg0: i32, %arg1: i32) -> (i32, i32) {
    %c0_i32 = arith.constant 0 : i32
    %c0_i32_0 = arith.constant 0 : i32
    %c0_i32_1 = arith.constant 0 : i32
    return %c0_i32, %c0_i32_0 : i32, i32
  }
  func.func @transform_4(%arg0: i32, %arg1: i32) -> (i32, i32) {
    %c0_i32 = arith.constant 0 : i32
    return %arg0, %arg1 : i32, i32
  }
}

</mosaic_0001>

<llo_original>
// kernel: lstm_kt_forward.1
$region0: #{lstm_kt_forward.1}
  #allocation0 [shape = 'u32[]', space=smem, size = 0x4, offset = 0x4, fixed_abs, tag = 'smem constant byte address 0x4 - core index']
  #allocation1 [shape = 'u32[144,128]{1,0:T(1,128)}', space=vmem, size = 0x12000, scoped, tag = 'internal scratch']
  #allocation2 [shape = 'f32[8,32]{1,0:T(8,128)}', space=vmem, size = 0x1000, scoped, tag = 'scratch operand']
  #allocation3 [shape = 'f32[8,32]{1,0:T(8,128)}', space=vmem, size = 0x1000, scoped, tag = 'scratch operand']
  #allocation4 [shape = 'f32[8,8,32]{2,1,0:T(8,128)}', space=vmem, size = 0x8000, scoped, tag = 'scratch operand']
  %s0 = inlined_call_operand.vmem [shape: f32[8,8,128], index: 0, kind: input, shape index: {}]
  %s1 = inlined_call_operand.vmem [shape: f32[8,8,32], index: 1, kind: input, shape index: {}]
  %s2 = inlined_call_operand.vmem [shape: f32[8,8], index: 2, kind: input, shape index: {}]
  %s3 = inlined_call_operand.vmem [shape: f32[32,128], index: 3, kind: input, shape index: {}]
  %s4 = inlined_call_operand.vmem [shape: f32[8,8], index: 4, kind: output, shape index: {}]
  %s5 = sld [smem:[#allocation0]]
  $region37: #{lstm_kt_forward.1} parent=0
    _
  %s7 = ssub.s32 1, %s5
  %s8 = scalar_select 0, %s7, %s5
  // Predicated region
  $region2: #{lstm_kt_forward.1} parent=0 // pred_check
    _
  $region3: #{lstm_kt_forward.1} parent=0 // pred_check_branch
    %10 = sbr.rel (0) target = $region5
  $region4: #{lstm_kt_forward.1} parent=0 // pred_region
    _
  $region5: #{lstm_kt_forward.1} parent=0 // pred_fallthru
    _
  // Predicated region
  $region6: #{lstm_kt_forward.1} parent=0 // pred_check
    _
  $region7: #{lstm_kt_forward.1} parent=0 // pred_check_branch
    %12 = sbr.rel (0) target = $region9
  $region8: #{lstm_kt_forward.1} parent=0 // pred_region
    _
  $region9: #{lstm_kt_forward.1} parent=0 // pred_fallthru
    _
  // Predicated region
  $region10: #{lstm_kt_forward.1} parent=0 // pred_check
    _
  $region11: #{lstm_kt_forward.1} parent=0 // pred_check_branch
    %14 = sbr.rel (0) target = $region13
  $region12: #{lstm_kt_forward.1} parent=0 // pred_region
    _
  $region13: #{lstm_kt_forward.1} parent=0 // pred_fallthru
    _
  // Predicated region
  $region14: #{lstm_kt_forward.1} parent=0 // pred_check
    _
  $region15: #{lstm_kt_forward.1} parent=0 // pred_check_branch
    %16 = sbr.rel (0) target = $region17
  $region16: #{lstm_kt_forward.1} parent=0 // pred_region
    _
  $region17: #{lstm_kt_forward.1} parent=0 // pred_fallthru
    _
  %p17 = scmp.eq.s32.totalorder 0, 0
  // Predicated region
  $region18: #{lstm_kt_forward.1} parent=0 // pred_check
    %p18 = pneg %p17
  $region19: #{lstm_kt_forward.1} parent=0 // pred_check_branch
    %20 = sbr.rel (%p18) target = $region21
  $region20: #{lstm_kt_forward.1} parent=0 // pred_region
    %vm21 = vcmask 261120
    %22 = vst.msk [vmem:[#allocation2] sm:$0xff] %vm21, 0.0
    %23 = vst.msk [vmem:[#allocation3] sm:$0xff] %vm21, 0.0
  $region21: #{lstm_kt_forward.1} parent=0 // pred_fallthru
    _
  %v24 = vld [vmem:[%s3] sm:$0xff]
  %v25 = vld [vmem:[%s3 + $0x8] sm:$0xff]
  %v26 = vld [vmem:[%s3 + $0x10] sm:$0xff]
  %v27 = vld [vmem:[%s3 + $0x18] sm:$0xff]
  loop: start=0, step=1, limit=8
  $region22: #{lstm_kt_forward.1} parent=0 // loop_pre_header
    _
  $region23: #{lstm_kt_forward.1} parent=0 // loop_header
    %s29 = sphi 0, %s33
    %p30 = scmp.ge.s32.totalorder %s29, 8
  $region24: #{lstm_kt_forward.1} parent=0 // loop_header_branch
    %32 = sbr.rel (%p30) target = $region28
  $region25: #{lstm_kt_forward.1} parent=0 // loop_body
    %s34 = smul.u32 %s29, 8
    %s35 = scalar_lea.vmem %s0, %s34
    %v36 = vld [vmem:[%s35] sm:$0xff]
    %v37 = vld [vmem:[#allocation2] sm:$0xff]
    %vm38 = vcmask 261120
    %v40 = vsel %vm38, %v37, 0
    %42 = vmatprep.subr.mxu0 0.0
    %43 = vmatpush1.msra.mxu0 %v24
    %44 = vmatprep.subr.mxu0 0.0
    %45 = vmatpush1.msra.mxu0 %v25
    %46 = vmatprep.subr.mxu0 0.0
    %47 = vmatpush1.msra.mxu0 %v26
    %48 = vmatprep.subr.mxu0 0.0
    %49 = vmatpush1.msra.mxu0 %v27
    %50 = vmatprep.subr.mxu0 0.0
    %51 = vmatpush1.msra.mxu0 0.0
    %52 = vmatprep.subr.mxu0 0.0
    %53 = vmatpush1.msra.mxu0 0.0
    %54 = vmatprep.subr.mxu0 0.0
    %55 = vmatpush1.msra.mxu0 0.0
    %56 = vmatprep.subr.mxu0 0.0
    %57 = vmatpush1.msra.mxu0 0.0
    %58 = vmatprep.subr.mxu0 0.0
    %59 = vmatpush1.msra.mxu0 0.0
    %60 = vmatprep.subr.mxu0 0.0
    %61 = vmatpush1.msra.mxu0 0.0
    %62 = vmatprep.subr.mxu0 0.0
    %63 = vmatpush1.msra.mxu0 0.0
    %64 = vmatprep.subr.mxu0 0.0
    %65 = vmatpush1.msra.mxu0 0.0
    %66 = vmatprep.subr.mxu0 0.0
    %67 = vmatpush1.msra.mxu0 0.0
    %68 = vmatprep.subr.mxu0 0.0
    %69 = vmatpush1.msra.mxu0 0.0
    %70 = vmatprep.subr.mxu0 0.0
    %71 = vmatpush1.msra.mxu0 0.0
    %72 = vmatprep.subr.mxu0 0.0
    %73 = vmatpush1.msra.mxu0 0.0
    %74 = vmatprep.subr.mxu0 0.0
    %75 = vmatpush1.msra.mxu0 0.0
    %76 = vmatprep.subr.mxu0 0.0
    %77 = vmatpush1.msra.mxu0 0.0
    %78 = vmatprep.subr.mxu0 0.0
    %79 = vmatpush1.msra.mxu0 0.0
    %80 = vmatprep.subr.mxu0 0.0
    %81 = vmatpush1.msra.mxu0 0.0
    %82 = vmatprep.subr.mxu0 0.0
    %83 = vmatpush1.msra.mxu0 0.0
    %84 = vmatprep.subr.mxu0 0.0
    %85 = vmatpush1.msra.mxu0 0.0
    %86 = vmatprep.subr.mxu0 0.0
    %87 = vmatpush1.msra.mxu0 0.0
    %88 = vmatprep.subr.mxu0 0.0
    %89 = vmatpush1.msra.mxu0 0.0
    %90 = vmatprep.subr.mxu0 0.0
    %91 = vmatpush1.msra.mxu0 0.0
    %92 = vmatprep.subr.mxu0 0.0
    %93 = vmatpush1.msra.mxu0 0.0
    %94 = vmatprep.subr.mxu0 0.0
    %95 = vmatpush1.msra.mxu0 0.0
    %96 = vmatprep.subr.mxu0 0.0
    %97 = vmatpush1.msra.mxu0 0.0
    %98 = vmatprep.subr.mxu0 0.0
    %99 = vmatpush1.msra.mxu0 0.0
    %100 = vmatprep.subr.mxu0 0.0
    %101 = vmatpush1.msra.mxu0 0.0
    %102 = vmatprep.subr.mxu0 0.0
    %103 = vmatpush1.msra.mxu0 0.0
    %104 = vmatprep.subr.mxu0 0.0
    %105 = vmatpush1.msra.mxu0 0.0
    %106 = vmatprep.mubr.f32.mxu0 0.0
    %107 = vmatmul.mubr.f32.gmra.mrb[0].mxu0 %v40
    %v108 = vpop.f32.mrb[0].mxu0
    %v109 = vadd.f32 0.0, %v108
    %v110 = vpop.f32.mrb[0].mxu0
    %111 = vdwg.mxu0
    %v112 = vadd.f32 %v36, %v109
    %v113 = vxor.u32 %v112, 2147483648
    %v114 = vmul.f32 %v113, 1.442695
    %v115 = vpow.pop %v114
    %v116 = vadd.f32 %v115, 1.0
    %v117 = vrcp.pop %v116
    %v118 = vmul.f32 1.0, %v117
    %v119 = vtanh.pop %v112
    %v120 = vld [vmem:[#allocation3] sm:$0xff]
    %122 = vrot.lane.b32.xlu0 %v120, 32
    %v123 = vpop.permute.xlu0 %122
    %v125 = vmul.f32 %v118, %v123
    %127 = vrot.lane.b32.xlu0 %v119, 64
    %v128 = vpop.permute.xlu0 %127
    %v130 = vmul.f32 %v118, %v128
    %132 = vrot.lane.b32.xlu0 %v130, 32
    %v133 = vpop.permute.xlu0 %132
    %v135 = vadd.f32 %v125, %v133
    %v136 = vtanh.pop %v135
    %138 = vrot.lane.b32.xlu0 %v136, 64
    %v139 = vpop.permute.xlu0 %138
    %v141 = vmul.f32 %v118, %v139
    %143 = vrot.lane.b32.xlu0 %v135, 96
    %v144 = vpop.permute.xlu0 %143
    %146 = vst.msk [vmem:[#allocation3] sm:$0xff] %vm38, %v144
    %148 = vrot.lane.b32.xlu0 %v141, 32
    %v149 = vpop.permute.xlu0 %148
    %151 = vst.msk [vmem:[#allocation2] sm:$0xff] %vm38, %v149
    %s152 = scalar_lea.vmem [#allocation4], %s34
    %153 = vst.msk [vmem:[%s152] sm:$0xff] %vm38, %v149
  $region26: #{lstm_kt_forward.1} parent=0 // loop_footer
    %s33 = sadd.s32 1, %s29
  $region27: #{lstm_kt_forward.1} parent=0 // loop_footer_branch
    %28 = sbr.rel target = $region23
  $region28: #{lstm_kt_forward.1} parent=0 // loop_exit
    _
  %v154 = vld [vmem:[#allocation4] sm:$0xff]
  %v155 = vld [vmem:[#allocation4 + $0x8] sm:$0xff]
  %v156 = vld [vmem:[#allocation4 + $0x10] sm:$0xff]
  %v157 = vld [vmem:[#allocation4 + $0x18] sm:$0xff]
  %v158 = vld [vmem:[#allocation4 + $0x20] sm:$0xff]
  %v159 = vld [vmem:[#allocation4 + $0x28] sm:$0xff]
  %v160 = vld [vmem:[#allocation4 + $0x30] sm:$0xff]
  %v161 = vld [vmem:[#allocation4 + $0x38] sm:$0xff]
  %v162 = vld [vmem:[%s1] sm:$0xff]
  %v163 = vld [vmem:[%s1 + $0x8] sm:$0xff]
  %v164 = vld [vmem:[%s1 + $0x10] sm:$0xff]
  %v165 = vld [vmem:[%s1 + $0x18] sm:$0xff]
  %v166 = vld [vmem:[%s1 + $0x20] sm:$0xff]
  %v167 = vld [vmem:[%s1 + $0x28] sm:$0xff]
  %v168 = vld [vmem:[%s1 + $0x30] sm:$0xff]
  %v169 = vld [vmem:[%s1 + $0x38] sm:$0xff]
  %v170 = vmul.f32 %v154, %v162
  %v171 = vmul.f32 %v155, %v163
  %v172 = vmul.f32 %v156, %v164
  %v173 = vmul.f32 %v157, %v165
  %v174 = vmul.f32 %v158, %v166
  %v175 = vmul.f32 %v159, %v167
  %v176 = vmul.f32 %v160, %v168
  %v177 = vmul.f32 %v161, %v169
  %vm178 = vcmask 261120
  %v179 = vsel %vm178, %v170, 0.0
  %180 = vadd.xlane.f32.xlu0 %v179
  %v181 = vpop.xlane.xlu0 %180
  %v182 = vsel %vm178, %v171, 0.0
  %183 = vadd.xlane.f32.xlu0 %v182
  %v184 = vpop.xlane.xlu0 %183
  %v185 = vsel %vm178, %v172, 0.0
  %186 = vadd.xlane.f32.xlu0 %v185
  %v187 = vpop.xlane.xlu0 %186
  %v188 = vsel %vm178, %v173, 0.0
  %189 = vadd.xlane.f32.xlu0 %v188
  %v190 = vpop.xlane.xlu0 %189
  %v191 = vsel %vm178, %v174, 0.0
  %192 = vadd.xlane.f32.xlu0 %v191
  %v193 = vpop.xlane.xlu0 %192
  %v194 = vsel %vm178, %v175, 0.0
  %195 = vadd.xlane.f32.xlu0 %v194
  %v196 = vpop.xlane.xlu0 %195
  %v197 = vsel %vm178, %v176, 0.0
  %198 = vadd.xlane.f32.xlu0 %v197
  %v199 = vpop.xlane.xlu0 %198
  %v200 = vsel %vm178, %v177, 0.0
  %201 = vadd.xlane.f32.xlu0 %v200
  %v202 = vpop.xlane.xlu0 %201
  %v203 = vld [vmem:[%s2] sm:$0xff]
  %v205 = vlaneseq
  %v206 = vshrl.u32 %v205, 7
  %v207 = vsub.s32 0, %v206
  %v208 = vrot.slane %v203, %v207
  %210 = vbcast.lane.b32.xlu0 %v208, 256
  %v211 = vpop.permute.xlu0 %210
  %v212 = vlaneseq
  %v213 = vshrl.u32 %v212, 7
  %v214 = vsub.s32 1, %v213
  %v215 = vrot.slane %v203, %v214
  %217 = vbcast.lane.b32.xlu0 %v215, 256
  %v218 = vpop.permute.xlu0 %217
  %v219 = vlaneseq
  %v220 = vshrl.u32 %v219, 7
  %v221 = vsub.s32 2, %v220
  %v222 = vrot.slane %v203, %v221
  %224 = vbcast.lane.b32.xlu0 %v222, 256
  %v225 = vpop.permute.xlu0 %224
  %v226 = vlaneseq
  %v227 = vshrl.u32 %v226, 7
  %v228 = vsub.s32 3, %v227
  %v229 = vrot.slane %v203, %v228
  %231 = vbcast.lane.b32.xlu0 %v229, 256
  %v232 = vpop.permute.xlu0 %231
  %v233 = vlaneseq
  %v234 = vshrl.u32 %v233, 7
  %v235 = vsub.s32 4, %v234
  %v236 = vrot.slane %v203, %v235
  %238 = vbcast.lane.b32.xlu0 %v236, 256
  %v239 = vpop.permute.xlu0 %238
  %v240 = vlaneseq
  %v241 = vshrl.u32 %v240, 7
  %v242 = vsub.s32 5, %v241
  %v243 = vrot.slane %v203, %v242
  %245 = vbcast.lane.b32.xlu0 %v243, 256
  %v246 = vpop.permute.xlu0 %245
  %v247 = vlaneseq
  %v248 = vshrl.u32 %v247, 7
  %v249 = vsub.s32 6, %v248
  %v250 = vrot.slane %v203, %v249
  %252 = vbcast.lane.b32.xlu0 %v250, 256
  %v253 = vpop.permute.xlu0 %252
  %v254 = vlaneseq
  %v255 = vshrl.u32 %v254, 7
  %v256 = vsub.s32 7, %v255
  %v257 = vrot.slane %v203, %v256
  %259 = vbcast.lane.b32.xlu0 %v257, 256
  %v260 = vpop.permute.xlu0 %259
  %v269 = vadd.f32 %v181, %v211
  %v270 = vadd.f32 %v184, %v218
  %v271 = vadd.f32 %v187, %v225
  %v272 = vadd.f32 %v190, %v232
  %v273 = vadd.f32 %v193, %v239
  %v274 = vadd.f32 %v196, %v246
  %v275 = vadd.f32 %v199, %v253
  %v276 = vadd.f32 %v202, %v260
  %v277 = vxor.u32 %v269, 2147483648
  %v278 = vxor.u32 %v270, 2147483648
  %v279 = vxor.u32 %v271, 2147483648
  %v280 = vxor.u32 %v272, 2147483648
  %v281 = vxor.u32 %v273, 2147483648
  %v282 = vxor.u32 %v274, 2147483648
  %v283 = vxor.u32 %v275, 2147483648
  %v284 = vxor.u32 %v276, 2147483648
  %v285 = vmul.f32 %v277, 1.442695
  %v286 = vpow.pop %v285
  %v287 = vmul.f32 %v278, 1.442695
  %v288 = vpow.pop %v287
  %v289 = vmul.f32 %v279, 1.442695
  %v290 = vpow.pop %v289
  %v291 = vmul.f32 %v280, 1.442695
  %v292 = vpow.pop %v291
  %v293 = vmul.f32 %v281, 1.442695
  %v294 = vpow.pop %v293
  %v295 = vmul.f32 %v282, 1.442695
  %v296 = vpow.pop %v295
  %v297 = vmul.f32 %v283, 1.442695
  %v298 = vpow.pop %v297
  %v299 = vmul.f32 %v284, 1.442695
  %v300 = vpow.pop %v299
  %v301 = vadd.f32 %v286, 1.0
  %v302 = vadd.f32 %v288, 1.0
  %v303 = vadd.f32 %v290, 1.0
  %v304 = vadd.f32 %v292, 1.0
  %v305 = vadd.f32 %v294, 1.0
  %v306 = vadd.f32 %v296, 1.0
  %v307 = vadd.f32 %v298, 1.0
  %v308 = vadd.f32 %v300, 1.0
  %v309 = vrcp.pop %v301
  %v310 = vmul.f32 1.0, %v309
  %v311 = vrcp.pop %v302
  %v312 = vmul.f32 1.0, %v311
  %v313 = vrcp.pop %v303
  %v314 = vmul.f32 1.0, %v313
  %v315 = vrcp.pop %v304
  %v316 = vmul.f32 1.0, %v315
  %v317 = vrcp.pop %v305
  %v318 = vmul.f32 1.0, %v317
  %v319 = vrcp.pop %v306
  %v320 = vmul.f32 1.0, %v319
  %v321 = vrcp.pop %v307
  %v322 = vmul.f32 1.0, %v321
  %v323 = vrcp.pop %v308
  %v324 = vmul.f32 1.0, %v323
  %333 = vset.pattern.permute.xlu0 0
  %334 = vperm.xlu0 %333, %v310
  %v335 = vpop.permute.xlu0 %334
  %336 = vset.pattern.permute.xlu0 0
  %337 = vperm.xlu0 %336, %v312
  %v338 = vpop.permute.xlu0 %337
  %339 = vset.pattern.permute.xlu0 0
  %340 = vperm.xlu0 %339, %v314
  %v341 = vpop.permute.xlu0 %340
  %342 = vset.pattern.permute.xlu0 0
  %343 = vperm.xlu0 %342, %v316
  %v344 = vpop.permute.xlu0 %343
  %345 = vset.pattern.permute.xlu0 0
  %346 = vperm.xlu0 %345, %v318
  %v347 = vpop.permute.xlu0 %346
  %348 = vset.pattern.permute.xlu0 0
  %349 = vperm.xlu0 %348, %v320
  %v350 = vpop.permute.xlu0 %349
  %351 = vset.pattern.permute.xlu0 0
  %352 = vperm.xlu0 %351, %v322
  %v353 = vpop.permute.xlu0 %352
  %354 = vset.pattern.permute.xlu0 0
  %355 = vperm.xlu0 %354, %v324
  %v356 = vpop.permute.xlu0 %355
  %v357 = vlaneseq
  %v358 = vand.u32 %v357, 127
  %v359 = vlaneseq
  %v360 = vshrl.u32 %v359, 7
  %v361 = vsub.s32 %v358, %v360
  %v362 = vrot.slane %v335, %v361
  %v363 = vlaneseq
  %v364 = vshrl.u32 %v363, 7
  %v365 = vsub.s32 %v358, %v364
  %v366 = vrot.slane %v338, %v365
  %v367 = vlaneseq
  %v368 = vshrl.u32 %v367, 7
  %v369 = vsub.s32 %v358, %v368
  %v370 = vrot.slane %v341, %v369
  %v371 = vlaneseq
  %v372 = vshrl.u32 %v371, 7
  %v373 = vsub.s32 %v358, %v372
  %v374 = vrot.slane %v344, %v373
  %v375 = vlaneseq
  %v376 = vshrl.u32 %v375, 7
  %v377 = vsub.s32 %v358, %v376
  %v378 = vrot.slane %v347, %v377
  %v379 = vlaneseq
  %v380 = vshrl.u32 %v379, 7
  %v381 = vsub.s32 %v358, %v380
  %v382 = vrot.slane %v350, %v381
  %v383 = vlaneseq
  %v384 = vshrl.u32 %v383, 7
  %v385 = vsub.s32 %v358, %v384
  %v386 = vrot.slane %v353, %v385
  %v387 = vlaneseq
  %v388 = vshrl.u32 %v387, 7
  %v389 = vsub.s32 %v358, %v388
  %v390 = vrot.slane %v356, %v389
  %vm391 = vcmask 1041409
  %v392 = vsel %vm391, %v366, %v362
  %vm393 = vcmask 1042434
  %v394 = vsel %vm393, %v370, %v392
  %vm395 = vcmask 1043459
  %v396 = vsel %vm395, %v374, %v394
  %vm397 = vcmask 1044484
  %v398 = vsel %vm397, %v378, %v396
  %vm399 = vcmask 1045509
  %v400 = vsel %vm399, %v382, %v398
  %vm401 = vcmask 1046534
  %v402 = vsel %vm401, %v386, %v400
  %vm403 = vcmask 1047559
  %v404 = vsel %vm403, %v390, %v402
  %406 = vxpose.xlu0.b32.start [1/16] %v404, 128
  %407 = vxpose.xlu0.b32.cont [2/16] 0.0, 128
  %408 = vxpose.xlu0.b32.cont [3/16] 0.0, 128
  %409 = vxpose.xlu0.b32.cont [4/16] 0.0, 128
  %410 = vxpose.xlu0.b32.cont [5/16] 0.0, 128
  %411 = vxpose.xlu0.b32.cont [6/16] 0.0, 128
  %412 = vxpose.xlu0.b32.cont [7/16] 0.0, 128
  %413 = vxpose.xlu0.b32.cont [8/16] 0.0, 128
  %414 = vxpose.xlu0.b32.cont [9/16] 0.0, 128
  %415 = vxpose.xlu0.b32.cont [10/16] 0.0, 128
  %416 = vxpose.xlu0.b32.cont [11/16] 0.0, 128
  %417 = vxpose.xlu0.b32.cont [12/16] 0.0, 128
  %418 = vxpose.xlu0.b32.cont [13/16] 0.0, 128
  %419 = vxpose.xlu0.b32.cont [14/16] 0.0, 128
  %420 = vxpose.xlu0.b32.cont [15/16] 0.0, 128
  %421 = vxpose.xlu0.b32.end [16/16] 0.0, 128
  %v422 = vpop.trf.xlu0
  %v423 = vpop.trf.xlu0
  %v424 = vpop.trf.xlu0
  %v425 = vpop.trf.xlu0
  %v426 = vpop.trf.xlu0
  %v427 = vpop.trf.xlu0
  %v428 = vpop.trf.xlu0
  %v429 = vpop.trf.xlu0
  %v430 = vpop.trf.xlu0
  %v431 = vpop.trf.xlu0
  %v432 = vpop.trf.xlu0
  %v433 = vpop.trf.xlu0
  %v434 = vpop.trf.xlu0
  %v435 = vpop.trf.xlu0
  %v436 = vpop.trf.xlu0
  %v437 = vpop.trf.xlu0
  %vm438 = vcmask 64512
  %439 = vst.msk [vmem:[%s4] sm:$0xff] %vm438, %v422
  // Predicated region
  $region29: #{lstm_kt_forward.1} parent=0 // pred_check
    _
  $region30: #{lstm_kt_forward.1} parent=0 // pred_check_branch
    %441 = sbr.rel (0) target = $region32
  $region31: #{lstm_kt_forward.1} parent=0 // pred_region
    _
  $region32: #{lstm_kt_forward.1} parent=0 // pred_fallthru
    _
  // Predicated region
  $region33: #{lstm_kt_forward.1} parent=0 // pred_check
    _
  $region34: #{lstm_kt_forward.1} parent=0 // pred_check_branch
    %443 = sbr.rel (0) target = $region36
  $region35: #{lstm_kt_forward.1} parent=0 // pred_region
    _
  $region36: #{lstm_kt_forward.1} parent=0 // pred_fallthru
    _

</llo_original>
